<compile_context>
chip_gen: v6e
topology: v6e:2x2x1
jax: 0.10.0
libtpu: 0.0.40
codegen_flags: <defaults>
</compile_context>

<pallas_src>
import numpy as np
import jax
import jax.numpy as jnp
from jax import lax
from jax.experimental import pallas as pl
from jax.experimental.pallas import tpu as pltpu

CLIP_SIZE = 224
CLIP_MEAN = np.array([0.48145466, 0.4578275, 0.40821073], np.float32)
CLIP_STD = np.array([0.26862954, 0.26130258, 0.27577711], np.float32)


# ---------------------------------------------------------------------------
# Host-side precomputation (tiny, trace-time constants)
# ---------------------------------------------------------------------------
def bilinear_matrix(out_size, in_size):
    """1-D interpolation matrix reproducing torch F.interpolate(bilinear,
    align_corners=False): out = A @ in."""
    scale = in_size / out_size
    d = np.arange(out_size)
    src = np.maximum((d + 0.5) * scale - 0.5, 0.0)
    i0 = np.minimum(np.floor(src).astype(np.int64), in_size - 1)
    i1 = np.minimum(i0 + 1, in_size - 1)
    lam = (src - i0).astype(np.float32)
    A = np.zeros((out_size, in_size), np.float32)
    A[d, i0] += (1.0 - lam)
    A[d, i1] += lam
    return A


def pool_matrix(patch):
    """(patch, 224) matrix averaging the 224//patch patches along one axis."""
    assert CLIP_SIZE % patch == 0
    n = CLIP_SIZE // patch
    P = np.zeros((patch, CLIP_SIZE), np.float32)
    for k in range(n):
        P[np.arange(patch), k * patch + np.arange(patch)] = 1.0 / n
    return P


def _pick_image_tile(B, bytes_per_image, budget=6 * 1024 * 1024, cap=32):
    """Largest divisor of B that (a) keeps one input block <= `budget` so two
    pipeline buffers fit every generation's scoped-VMEM default, (b) leaves
    >= 2 grid steps (double buffering + v7x megacore), (c) is <= cap."""
    limit = max(1, min(cap, budget // max(1, bytes_per_image)))
    if B >= 2:
        limit = min(limit, max(1, B // 2))
    bt = 1
    for d in range(1, B + 1):
        if B % d == 0 and d <= limit:
            bt = d
    return bt


def _pick_head_tile(B):
    """(tile, padded_B) for Kernel B: tile is a multiple of 8, up to 256 rows,
    with >= 2 grid steps whenever the padded batch allows it."""
    b_pad = ((B + 7) // 8) * 8
    if b_pad <= 8:
        return b_pad, b_pad
    bt = min(256, max(8, (b_pad // 2) // 8 * 8))
    b_pad = ((b_pad + bt - 1) // bt) * bt
    return bt, b_pad


# ---------------------------------------------------------------------------
# Kernel A: fused bilinear-resize + patch-mean pooling
# ---------------------------------------------------------------------------
def resize_pool_kernel(x_ref, mwt_ref, mh_ref, o_ref):
    """Per batch block: pooled[i, c] = M_h @ X[i, c] @ M_w^T.

    M_h (p,H) / M_w^T (W,p) fold (bilinear resize to 224x224) o (mean over the
    (224/p)^2 patches).  Stage 1 is one big GEMM over the whole block
    (M = bt*3*H rows fills the MXU); stage 2 is a batched small matmul."""
    bt, C, H, W = x_ref.shape
    p = mh_ref.shape[0]

    # Layout-free merge of the leading dims (H is padded to a multiple of 16
    # on the host so the sublane tiles line up for f32 and bf16 alike).
    x = x_ref[...].reshape(bt * C * H, W).astype(jnp.bfloat16)
    mwt = mwt_ref[...]                                           # (W, p) bf16

    # Stage 1: single MXU-filling GEMM, bf16 x bf16 -> f32 accumulate.
    y = jnp.dot(x, mwt, preferred_element_type=jnp.float32)      # (bt*C*H, p)
    y3 = y.reshape(bt * C, H, p).astype(jnp.bfloat16)            # free split

    # Stage 2: batched (p,H)@(H,p); M_h broadcast hoisted once per grid step.
    mh_b = jnp.broadcast_to(mh_ref[...][None], (bt * C, p, H))   # bf16
    z = lax.dot_general(mh_b, y3,
                        dimension_numbers=(((2,), (1,)), ((0,), (0,))),
                        preferred_element_type=jnp.float32)       # (bt*C, p, p)

    # Single bulk store of the whole output block.
    o_ref[...] = z.reshape(bt, C, p, p).astype(o_ref.dtype)


def images_to_pooled_patches(enhanced, patch):
    """(B, 3, H, W) -> (B, 3*patch*patch) bf16 mean-of-patch vectors of the
    bilinearly resized 224x224 image.  The 224x224 image is never materialized
    and the CLIP mean/std normalization is folded into the downstream
    projection (pooling weights sum to 1, so it commutes)."""
    B, C, H, W = enhanced.shape
    assert C == 3
    P64 = pool_matrix(patch).astype(np.float64)
    M_h = (P64 @ bilinear_matrix(CLIP_SIZE, H).astype(np.float64)).astype(np.float32)
    M_wT = (P64 @ bilinear_matrix(CLIP_SIZE, W).astype(np.float64)).T.astype(np.float32)

    # Pad H to a multiple of 16 so the in-kernel leading-dim reshapes stay
    # layout-free for both f32 (8-row) and bf16 (16-row) tiles.  Zero rows in
    # the image are matched by zero columns in M_h, so the result is unchanged.
    H_pad = ((H + 15) // 16) * 16
    if H_pad != H:
        M_h = np.pad(M_h, ((0, 0), (0, H_pad - H)))
        enhanced = jnp.pad(enhanced, ((0, 0), (0, 0), (0, H_pad - H), (0, 0)))

    bytes_per_image = 3 * H_pad * W * enhanced.dtype.itemsize
    bt = _pick_image_tile(B, bytes_per_image)

    pooled = pl.pallas_call(
        resize_pool_kernel,
        out_shape=jax.ShapeDtypeStruct((B, 3, patch, patch), jnp.bfloat16),
        grid=(B // bt,),
        in_specs=[
            pl.BlockSpec((bt, 3, H_pad, W), lambda i: (i, 0, 0, 0)),
            pl.BlockSpec((W, patch), lambda i: (0, 0)),        # M_w^T (host-transposed)
            pl.BlockSpec((patch, H_pad), lambda i: (0, 0)),    # M_h
        ],
        out_specs=pl.BlockSpec((bt, 3, patch, patch), lambda i: (i, 0, 0, 0)),
        compiler_params=pltpu.CompilerParams(
            dimension_semantics=("parallel",),
            vmem_limit_bytes=32 * 1024 * 1024),
    )(enhanced, jnp.asarray(M_wT, jnp.bfloat16), jnp.asarray(M_h, jnp.bfloat16))

    # Contiguous reshape of a tiny (B, 3*p*p) tensor; the heavy image traffic
    # stays inside the kernel.  (A fully lane-dense in-kernel store would need
    # a sublane->lane relayout with uncertain Mosaic lowering support.)
    return pooled.reshape(B, 3 * patch * patch)


# ---------------------------------------------------------------------------
# Kernel B: synthetic CLIP head + MaskedSoftmax + BCE-vs-ones (per image)
# ---------------------------------------------------------------------------
def clip_head_kernel(pooled_ref, w_ref, bias_ref, textT_ref, mask_ref, pos_ref,
                     loss_ref):
    # Patch-embed projection (+ folded CLIP mean/std bias); bf16 operands,
    # f32 accumulation, lane-dense N = 128.
    img = jnp.dot(pooled_ref[...], w_ref[...],
                  preferred_element_type=jnp.float32) + bias_ref[...]
    img = img * lax.rsqrt(jnp.sum(img * img, axis=-1, keepdims=True) + 1e-12)

    # logits_per_image = logit_scale * img_norm @ text_norm^T; the text matrix
    # is L2-normalized and scale-folded once on the host.
    logits = jnp.dot(img.astype(jnp.bfloat16), textT_ref[...],
                     preferred_element_type=jnp.float32)
    logits = jnp.maximum(logits, 1e-6)          # torch.clip(x, 1e-6, None)

    n_items = logits.shape[-1]
    if n_items == 2:
        # MaskedSoftmax short-circuit for x.size(1) == 2 (mask ignored).
        m = jnp.max(logits, axis=-1, keepdims=True)
        e = jnp.exp(logits - m)
        sm = e / jnp.sum(e, axis=-1, keepdims=True)
    else:
        # Exact torch semantics: masked_fill(mask.bool(), -inf) puts -inf at
        # the KEPT columns, so the stabilizer max is over the other columns --
        # mirrored deliberately (same behaviour as the reference, including
        # its overflow characteristics at very large logit scales).
        mask = mask_ref[...]
        x_masked = jnp.where(mask > 0, -jnp.inf, logits)
        x_max = jnp.max(x_masked, axis=-1, keepdims=True)
        x_exp = jnp.exp(logits - x_max) * mask
        sm = x_exp / jnp.sum(x_exp, axis=-1, keepdims=True)

    sm_ce = jnp.sum(sm * pos_ref[...], axis=-1, keepdims=True)   # (bt, 1)
    # BCELoss(p, 1) = -log(p), with log clamped at -100 (torch behaviour).
    loss_ref[...] = -jnp.maximum(jnp.log(sm_ce), -100.0)


def clip_head_loss(pooled, w_patch, proj_bias, text_embT, mask, pos_mask, bt):
    B_pad, F = pooled.shape
    Dp = w_patch.shape[1]
    n_items = text_embT.shape[1]
    return pl.pallas_call(
        clip_head_kernel,
        out_shape=jax.ShapeDtypeStruct((B_pad, 1), jnp.float32),
        grid=(B_pad // bt,),
        in_specs=[
            pl.BlockSpec((bt, F), lambda i: (i, 0)),             # pooled (bf16)
            pl.BlockSpec((F, Dp), lambda i: (0, 0)),             # w_patch (bf16)
            pl.BlockSpec((1, Dp), lambda i: (0, 0)),             # folded-norm bias
            pl.BlockSpec((Dp, n_items), lambda i: (0, 0)),       # text_emb^T (bf16)
            pl.BlockSpec((bt, n_items), lambda i: (i, 0)),       # mask
            pl.BlockSpec((bt, n_items), lambda i: (i, 0)),       # pos_mask
        ],
        out_specs=pl.BlockSpec((bt, 1), lambda i: (i, 0)),
        compiler_params=pltpu.CompilerParams(
            dimension_semantics=("parallel",)),
    )(pooled, w_patch, proj_bias, text_embT, mask, pos_mask)


# ---------------------------------------------------------------------------
# Module-equivalent wrapper (glue in plain JAX / numpy)
# ---------------------------------------------------------------------------
def make_l_clip_bce_label(classes, embed_dim=32, patch=32, seed=0):
    """Deterministic synthetic parameters standing in for label_clip_model.

    The embedding dim is zero-padded to a multiple of 128 (lane-dense matmuls;
    zero columns change neither the L2 norms nor the dot products).  The CLIP
    mean/std normalization is folded into the patch-embedding weight (row
    scale + constant bias) and the text embeddings are L2-normalized and
    logit_scale-scaled once, so none of this constant work is redone per
    kernel step."""
    d_pad = ((embed_dim + 127) // 128) * 128
    feat = 3 * patch * patch
    key = jax.random.PRNGKey(seed)
    k_w, k_t = jax.random.split(key)
    w = np.asarray(jax.random.normal(k_w, (feat, embed_dim), jnp.float32)) * 0.02

    # fold (x - mean) / std into the projection; feature order is (c, py, px)
    inv_std_rows = np.repeat((1.0 / CLIP_STD).astype(np.float32), patch * patch)
    mean_rows = np.repeat(CLIP_MEAN, patch * patch)
    w_eff = w * inv_std_rows[:, None]
    bias = -(mean_rows[None, :] @ w_eff)                      # (1, embed_dim)
    w_pad = np.zeros((feat, d_pad), np.float32)
    w_pad[:, :embed_dim] = w_eff
    bias_pad = np.zeros((1, d_pad), np.float32)
    bias_pad[:, :embed_dim] = bias

    # one (pos, neg) text embedding pair per class, interleaved like the
    # prompt list in the torch module: [pos(c0), neg(c0), pos(c1), ...]
    t = np.asarray(jax.random.normal(k_t, (2 * len(classes), embed_dim), jnp.float32))
    t = t / np.linalg.norm(t, axis=-1, keepdims=True)         # host-side L2 norm
    # real CLIP uses exp(logit_scale) ~ 100; a moderate value keeps the
    # synthetic demo numerically sane.  Folded into the text matrix.
    logit_scale = 20.0
    t_padT = np.zeros((d_pad, 2 * len(classes)), np.float32)
    t_padT[:embed_dim, :] = (logit_scale * t).T

    return {
        "w_patch": jnp.asarray(w_pad, jnp.bfloat16),      # (3*p*p, d_pad)
        "proj_bias": jnp.asarray(bias_pad, jnp.float32),  # (1, d_pad)
        "text_embT": jnp.asarray(t_padT, jnp.bfloat16),   # (d_pad, 2C)
        "patch": patch,
        "classes": list(classes),
    }


def l_clip_bce_label_forward(enhanced, labels, params, weight=1.0):
    classes = params["classes"]
    patch = params["patch"]
    B = enhanced.shape[0]
    C = len(classes)
    lbl = np.array([classes.index(l) for l in labels], np.int64)

    # Kernel A: fused resize + patch-mean pooling (normalization folded away).
    pooled = images_to_pooled_patches(enhanced, patch)        # (B, 3*p*p) bf16

    # Pad the batch to a multiple-of-8 tile for Kernel B (sublane alignment,
    # large MXU row fill); padded rows reuse class 0 and are dropped below.
    bt_b, B_pad = _pick_head_tile(B)
    if B_pad != B:
        pooled = jnp.pad(pooled, ((0, B_pad - B), (0, 0)))
    lbl_pad = np.zeros(B_pad, np.int64)
    lbl_pad[:B] = lbl

    # create_mask / create_pos_mask (host, tiny)
    mask = np.zeros((B_pad, 2 * C), np.float32)
    pos_mask = np.zeros((B_pad, 2 * C), np.float32)
    rows = np.arange(B_pad)
    mask[rows, 2 * lbl_pad] = 1.0
    mask[rows, 2 * lbl_pad + 1] = 1.0
    pos_mask[rows, 2 * lbl_pad] = 1.0

    # Kernel B: projection -> L2 norm -> similarity -> masked softmax -> BCE.
    per_img = clip_head_loss(pooled, params["w_patch"], params["proj_bias"],
                             params["text_embT"], jnp.asarray(mask),
                             jnp.asarray(pos_mask), bt_b)      # (B_pad, 1)

    # levels == [1]: sum(out_levels)/1, with weight applied twice as in torch.
    return (weight * weight) * jnp.mean(per_img[:B, 0])


if __name__ == "__main__":
    key = jax.random.PRNGKey(0)
    B, H, W = 2, 16, 16
    # bf16 input exercises the halved-HBM-read fast path; f32 inputs also work
    # (the kernel casts its block inside VMEM).
    enhanced = jax.random.uniform(key, (B, 3, H, W), jnp.float32).astype(jnp.bfloat16)
    labels = ["cat", "dog"]
    # deterministic stand-in for `list(set(labels))` in the torch forward
    classes = list(dict.fromkeys(labels))

    params = make_l_clip_bce_label(classes, embed_dim=32, patch=32, seed=0)
    out = l_clip_bce_label_forward(enhanced, labels, params, weight=1.0)
    out = jax.block_until_ready(out)
    assert out.shape == () and jnp.isfinite(out)
    print("KERNEL_OK")
</pallas_src>

<mosaic_0001>
module attributes {stable_mosaic.version = 11 : i64} {
  func.func @resize_pool_kernel(%arg0: i32, %arg1: memref<1x3x16x16xbf16, #tpu.memory_space<vmem>>, %arg2: memref<16x32xbf16, #tpu.memory_space<vmem>>, %arg3: memref<32x16xbf16, #tpu.memory_space<vmem>>, %arg4: memref<1x3x32x32xbf16, #tpu.memory_space<vmem>>) attributes {dimension_semantics = [#tpu.dimension_semantics<parallel>], iteration_bounds = array<i64: 2>, scalar_prefetch = 0 : i64, scratch_operands = 0 : i64, tpu.core_type = #tpu.core_type<tc>, window_params = [{transform_indices = @transform_0, window_bounds = array<i64: 1, 3, 16, 16>}, {pipeline_mode = #tpu.pipeline_mode<synchronous>, transform_indices = @transform_1, window_bounds = array<i64: 16, 32>}, {pipeline_mode = #tpu.pipeline_mode<synchronous>, transform_indices = @transform_2, window_bounds = array<i64: 32, 16>}, {transform_indices = @transform_3, window_bounds = array<i64: 1, 3, 32, 32>}]} {
    %c0 = arith.constant 0 : index
    %c0_0 = arith.constant 0 : index
    %c0_1 = arith.constant 0 : index
    %c0_2 = arith.constant 0 : index
    %0 = vector.load %arg1[%c0, %c0_0, %c0_1, %c0_2] : memref<1x3x16x16xbf16, #tpu.memory_space<vmem>>, vector<1x3x16x16xbf16>
    %1 = vector.shape_cast %0 : vector<1x3x16x16xbf16> to vector<48x16xbf16>
    %c0_3 = arith.constant 0 : index
    %c0_4 = arith.constant 0 : index
    %2 = vector.load %arg2[%c0_3, %c0_4] : memref<16x32xbf16, #tpu.memory_space<vmem>>, vector<16x32xbf16>
    %cst = arith.constant dense<0.000000e+00> : vector<48x32xf32>
    %3 = tpu.matmul %1, %2, %cst {dimension_numbers = #tpu.dot_dimension_numbers<[1], [0], [0], [1], [0, 0, 1, 1], [], []>} : vector<48x16xbf16>, vector<16x32xbf16>, vector<48x32xf32> -> vector<48x32xf32>
    %4 = vector.shape_cast %3 : vector<48x32xf32> to vector<3x16x32xf32>
    %5 = arith.truncf %4 : vector<3x16x32xf32> to vector<3x16x32xbf16>
    %c0_5 = arith.constant 0 : index
    %c0_6 = arith.constant 0 : index
    %6 = vector.load %arg3[%c0_5, %c0_6] : memref<32x16xbf16, #tpu.memory_space<vmem>>, vector<32x16xbf16>
    %7 = vector.shape_cast %6 : vector<32x16xbf16> to vector<1x32x16xbf16>
    %8 = vector.shape_cast %7 : vector<1x32x16xbf16> to vector<1x32x16xbf16>
    %9 = vector.broadcast %8 : vector<1x32x16xbf16> to vector<3x32x16xbf16>
    %cst_7 = arith.constant dense<0.000000e+00> : vector<3x32x32xf32>
    %10 = tpu.matmul %9, %5, %cst_7 {dimension_numbers = #tpu.dot_dimension_numbers<[2], [1], [1], [2], [0, 0, 0, 1, 1, 2], [0], [0]>} : vector<3x32x16xbf16>, vector<3x16x32xbf16>, vector<3x32x32xf32> -> vector<3x32x32xf32>
    %11 = vector.shape_cast %10 : vector<3x32x32xf32> to vector<1x3x32x32xf32>
    %12 = arith.truncf %11 : vector<1x3x32x32xf32> to vector<1x3x32x32xbf16>
    %c0_8 = arith.constant 0 : index
    %c0_9 = arith.constant 0 : index
    %c0_10 = arith.constant 0 : index
    %c0_11 = arith.constant 0 : index
    %13 = vector.load %arg4[%c0_8, %c0_9, %c0_10, %c0_11] : memref<1x3x32x32xbf16, #tpu.memory_space<vmem>>, vector<1x3x32x32xbf16>
    tpu.vector_store %arg4[%c0_8, %c0_9, %c0_10, %c0_11], %12 {strides = array<i32>} : memref<1x3x32x32xbf16, #tpu.memory_space<vmem>>, vector<1x3x32x32xbf16>,
    return
  }
  func.func @transform_0(%arg0: i32) -> (i32, i32, i32, i32) {
    %c0_i32 = arith.constant 0 : i32
    %c0_i32_0 = arith.constant 0 : i32
    %c0_i32_1 = arith.constant 0 : i32
    %c0_i32_2 = arith.constant 0 : i32
    return %arg0, %c0_i32, %c0_i32_0, %c0_i32_1 : i32, i32, i32, i32
  }
  func.func @transform_1(%arg0: i32) -> (i32, i32) {
    %c0_i32 = arith.constant 0 : i32
    %c0_i32_0 = arith.constant 0 : i32
    %c0_i32_1 = arith.constant 0 : i32
    return %c0_i32, %c0_i32_0 : i32, i32
  }
  func.func @transform_2(%arg0: i32) -> (i32, i32) {
    %c0_i32 = arith.constant 0 : i32
    %c0_i32_0 = arith.constant 0 : i32
    %c0_i32_1 = arith.constant 0 : i32
    return %c0_i32, %c0_i32_0 : i32, i32
  }
  func.func @transform_3(%arg0: i32) -> (i32, i32, i32, i32) {
    %c0_i32 = arith.constant 0 : i32
    %c0_i32_0 = arith.constant 0 : i32
    %c0_i32_1 = arith.constant 0 : i32
    %c0_i32_2 = arith.constant 0 : i32
    return %arg0, %c0_i32, %c0_i32_0, %c0_i32_1 : i32, i32, i32, i32
  }
}

</mosaic_0001>

<llo_original>
// kernel: tpu_custom_call.1
$region0: #{tpu_custom_call.1}
  #allocation0 [shape = 'u32[]', space=smem, size = 0x4, offset = 0x4, fixed_abs, tag = 'smem constant byte address 0x4 - core index']
  #allocation1 [shape = 'u32[144,128]{1,0:T(1,128)}', space=vmem, size = 0x12000, scoped, tag = 'internal scratch']
  %s0 = inlined_call_operand.hbm [shape: bf16[2,3,16,16], index: 0, kind: input, shape index: {}]
  %s1 = inlined_call_operand.vmem [shape: bf16[16,32], index: 1, kind: input, shape index: {}]
  %s2 = inlined_call_operand.vmem [shape: bf16[32,16], index: 2, kind: input, shape index: {}]
  %s3 = inlined_call_operand.hbm [shape: bf16[2,3,32,32], index: 3, kind: output, shape index: {}]
  %s4 = sld [smem:[#allocation0]]
  $region49: #{tpu_custom_call.1} parent=0
    _
  %s6 = ssub.s32 1, %s4
  %s7 = scalar_select 0, %s6, %s4
  $region1: #{tpu_custom_call.1} parent=0
    #allocation2 [shape = 'u8[24576]{0}', space=vmem, size = 0x6000, scoped, tag = 'input window, operand 0']
    #allocation3 [shape = 's32[2]{0}', space=sflag, size = 0x8, scoped, tag = 'scoped memory for tpu_custom_call.1']
    #allocation4 [shape = 's32[2]{0}', space=sflag, size = 0x8, scoped, tag = 'scoped memory for tpu_custom_call.1']
    #allocation5 [shape = 'u8[49152]{0}', space=vmem, size = 0xc000, scoped, tag = 'output window, operand 0']
    %8 = vsyncpa [#allocation3], 0
    %s9 = scalar_lea.sflag [#allocation3], 1
    %10 = vsyncpa %s9, 0
    %11 = vsyncpa [#allocation4], 0
    %s12 = scalar_lea.sflag [#allocation4], 1
    %13 = vsyncpa %s12, 0
    loop: start=0, step=1, limit=4
    $region2: #{tpu_custom_call.1} parent=1 // loop_pre_header
      _
    $region3: #{tpu_custom_call.1} parent=1 // loop_header
      %s15 = sphi 0, %s19
      %p16 = scmp.ge.s32.totalorder %s15, 4
      %s25 = sphi 0, %s27
      %s28 = sphi 0, %s25
      %s29 = sphi 0, %s28
      %s45 = sphi 0, %s29
      %s49 = sphi 0, %s49
      %s51 = sphi 0, %s49
      %s52 = sphi 0, %s51
      %s66 = sphi 0, %s52
      %s70 = sphi 0, %s70
      %s72 = sphi 0, %s70
      %s73 = sphi 0, %s72
      %s87 = sphi 0, %s73
      %s93 = sphi 0, %s95
      %s96 = sphi 0, %s93
      %s97 = sphi 0, %s96
      %s113 = sphi 0, %s97
    $region4: #{tpu_custom_call.1} parent=1 // loop_header_branch
      %18 = sbr.rel (%p16) target = $region8
    $region5: #{tpu_custom_call.1} parent=1 // loop_body
      %s20 = ssub.s32 %s15, 1
      %s21 = ssub.s32 %s15, 2
      %s22 = sadd.s32 %s15, 1
      %s23 = ssub.s32 %s15, %s22
      %p24 = scmp.eq.s32.totalorder %s23, 0
      %s26 = sadd.s32 %s25, 1
      %s27 = scalar_select %p24, %s25, %s26
      %p30 = pneg %p24
      %p31 = scmp.eq.s32.totalorder %s15, 1
      %p32 = por %p30, %p31
      %p33 = scmp.ne.s32.totalorder %s25, %s28
      %p34 = scmp.eq.s32.totalorder %s15, 0
      %p35 = por %p33, %p34
      %p36 = scmp.ne.s32.totalorder %s25, %s28
      %p37 = scmp.eq.s32.totalorder %s20, 1
      %p38 = por %p36, %p37
      %p39 = scmp.ne.s32.totalorder %s28, %s29
      %p40 = scmp.eq.s32.totalorder %s20, 0
      %p41 = por %p39, %p40
      %p42 = scmp.ne.s32.totalorder %s28, %s29
      %p43 = scmp.eq.s32.totalorder %s21, 1
      %p44 = por %p42, %p43
      %p46 = scmp.ne.s32.totalorder %s29, %s45
      %p47 = scmp.eq.s32.totalorder %s21, 0
      %p48 = por %p46, %p47
      %s50 = sadd.s32 %s49, 1
      %p53 = scmp.eq.s32.totalorder %s15, 1
      %p54 = scmp.ne.s32.totalorder %s49, %s51
      %p55 = scmp.eq.s32.totalorder %s15, 0
      %p56 = por %p54, %p55
      %p57 = scmp.ne.s32.totalorder %s49, %s51
      %p58 = scmp.eq.s32.totalorder %s20, 1
      %p59 = por %p57, %p58
      %p60 = scmp.ne.s32.totalorder %s51, %s52
      %p61 = scmp.eq.s32.totalorder %s20, 0
      %p62 = por %p60, %p61
      %p63 = scmp.ne.s32.totalorder %s51, %s52
      %p64 = scmp.eq.s32.totalorder %s21, 1
      %p65 = por %p63, %p64
      %p67 = scmp.ne.s32.totalorder %s52, %s66
      %p68 = scmp.eq.s32.totalorder %s21, 0
      %p69 = por %p67, %p68
      %s71 = sadd.s32 %s70, 1
      %p74 = scmp.eq.s32.totalorder %s15, 1
      %p75 = scmp.ne.s32.totalorder %s70, %s72
      %p76 = scmp.eq.s32.totalorder %s15, 0
      %p77 = por %p75, %p76
      %p78 = scmp.ne.s32.totalorder %s70, %s72
      %p79 = scmp.eq.s32.totalorder %s20, 1
      %p80 = por %p78, %p79
      %p81 = scmp.ne.s32.totalorder %s72, %s73
      %p82 = scmp.eq.s32.totalorder %s20, 0
      %p83 = por %p81, %p82
      %p84 = scmp.ne.s32.totalorder %s72, %s73
      %p85 = scmp.eq.s32.totalorder %s21, 1
      %p86 = por %p84, %p85
      %p88 = scmp.ne.s32.totalorder %s73, %s87
      %p89 = scmp.eq.s32.totalorder %s21, 0
      %p90 = por %p88, %p89
      %s91 = ssub.s32 %s15, %s22
      %p92 = scmp.eq.s32.totalorder %s91, 0
      %s94 = sadd.s32 %s93, 1
      %s95 = scalar_select %p92, %s93, %s94
      %p98 = pneg %p92
      %p99 = scmp.eq.s32.totalorder %s15, 1
      %p100 = por %p98, %p99
      %p101 = scmp.ne.s32.totalorder %s93, %s96
      %p102 = scmp.eq.s32.totalorder %s15, 0
      %p103 = por %p101, %p102
      %p104 = scmp.ne.s32.totalorder %s93, %s96
      %p105 = scmp.eq.s32.totalorder %s20, 1
      %p106 = por %p104, %p105
      %p107 = scmp.ne.s32.totalorder %s96, %s97
      %p108 = scmp.eq.s32.totalorder %s20, 0
      %p109 = por %p107, %p108
      %p110 = scmp.ne.s32.totalorder %s96, %s97
      %p111 = scmp.eq.s32.totalorder %s21, 1
      %p112 = por %p110, %p111
      %p114 = scmp.ne.s32.totalorder %s97, %s113
      %p115 = scmp.eq.s32.totalorder %s21, 0
      %p116 = por %p114, %p115
      %p117 = scmp.le.s32.totalorder 1, %s15
      %p118 = scmp.lt.s32.totalorder %s15, 3
      %p119 = pnand %p117, %p118
      %p120 = pneg %p119
      // Predicated region
      $region9: #{tpu_custom_call.1} parent=5 // pred_check
        _
      $region10: #{tpu_custom_call.1} parent=5 // pred_check_branch
        %122 = sbr.rel (%p119) target = $region12
      $region11: #{tpu_custom_call.1} parent=5 // pred_region
        %s123 = ssub.s32 %s15, 1
        // Predicated region
        $region13: #{tpu_custom_call.1} parent=11 // pred_check
          %p124 = pneg %p62
        $region14: #{tpu_custom_call.1} parent=11 // pred_check_branch
          %126 = sbr.rel (%p124) target = $region16
        $region15: #{tpu_custom_call.1} parent=11 // pred_region
          _
        $region16: #{tpu_custom_call.1} parent=11 // pred_fallthru
          _
        // Predicated region
        $region17: #{tpu_custom_call.1} parent=11 // pred_check
          %p127 = pneg %p83
        $region18: #{tpu_custom_call.1} parent=11 // pred_check_branch
          %129 = sbr.rel (%p127) target = $region20
        $region19: #{tpu_custom_call.1} parent=11 // pred_region
          _
        $region20: #{tpu_custom_call.1} parent=11 // pred_fallthru
          _
      $region12: #{tpu_custom_call.1} parent=5 // pred_fallthru
        _
      %p130 = scmp.lt.s32.totalorder %s15, 2
      // Predicated region
      $region21: #{tpu_custom_call.1} parent=5 // pred_check
        %p131 = pneg %p130
      $region22: #{tpu_custom_call.1} parent=5 // pred_check_branch
        %133 = sbr.rel (%p131) target = $region24
      $region23: #{tpu_custom_call.1} parent=5 // pred_region
        // Predicated region
        $region25: #{tpu_custom_call.1} parent=23 // pred_check
          %p134 = pneg %p35
        $region26: #{tpu_custom_call.1} parent=23 // pred_check_branch
          %136 = sbr.rel (%p134) target = $region28
        $region27: #{tpu_custom_call.1} parent=23 // pred_region
          %s137 = sand.u32 %s25, 1
          %s138 = scalar_lea.sflag [#allocation3], %s137
          %s139 = sand.u32 %s25, 1
          %s140 = smul.addr %s139, 24
          %s141 = scalar_lea.vmem [#allocation2], %s140
          %s143 = ssub.s32 384, 384
          %144 = vsyncadd %s138, %s143
          %s145 = smul.addr %s15, 6
          %s146 = smul.addr %s145, 64
          %s147 = scalar_lea.hbm %s0, %s146
          %s148 = sshll.u32 %s141, 4
          %s149 = int_to_ptr.vmem [resolvable:$true] %s148
          %154 = dma.hbm_to_vmem [thread:$0]  %s147, 384, %s149, %s138, 64, 64, 4
        $region28: #{tpu_custom_call.1} parent=23 // pred_fallthru
          _
      $region24: #{tpu_custom_call.1} parent=5 // pred_fallthru
        _
      %p155 = scmp.le.s32.totalorder 1, %s15
      %p156 = scmp.lt.s32.totalorder %s15, 3
      %p157 = pnand %p155, %p156
      %p158 = pneg %p157
      // Predicated region
      $region29: #{tpu_custom_call.1} parent=5 // pred_check
        _
      $region30: #{tpu_custom_call.1} parent=5 // pred_check_branch
        %160 = sbr.rel (%p157) target = $region32
      $region31: #{tpu_custom_call.1} parent=5 // pred_region
        %s161 = ssub.s32 %s15, 1
        %s162 = sand.u32 %s28, 1
        %s163 = scalar_lea.sflag [#allocation3], %s162
        %s164 = sand.u32 %s28, 1
        %s165 = smul.addr %s164, 24
        %s166 = scalar_lea.vmem [#allocation2], %s165
        // Predicated region
        $region33: #{tpu_custom_call.1} parent=31 // pred_check
          %p167 = pneg %p41
        $region34: #{tpu_custom_call.1} parent=31 // pred_check_branch
          %169 = sbr.rel (%p167) target = $region36
        $region35: #{tpu_custom_call.1} parent=31 // pred_region
          %170 = dma.done %s163, 384
        $region36: #{tpu_custom_call.1} parent=31 // pred_fallthru
          _
        %s171 = sand.u32 %s28, 1
        %s172 = scalar_lea.sflag [#allocation3], %s171
        %s173 = sand.u32 %s28, 1
        %s174 = smul.addr %s173, 24
        %s175 = scalar_lea.vmem [#allocation2], %s174
        %p176 = pneg %p41
        %p177 = pneg %p38
        %p178 = pneg %p62
        %p179 = pneg %p59
        %p180 = pneg %p83
        %p181 = pneg %p80
        %p182 = pneg %p109
        %p183 = pneg %p106
        %s184 = sand.u32 %s96, 1
        %s185 = scalar_lea.sflag [#allocation4], %s184
        %s186 = sand.u32 %s96, 1
        %s187 = smul.addr %s186, 48
        %s188 = scalar_lea.vmem [#allocation5], %s187
        %v190 = vld [vmem:[%s166] sm:$0xf]
        %v191 = vld [vmem:[%s166 + $0x4] sm:$0xf]
        %v192 = vld [vmem:[%s166 + $0x8] sm:$0xf]
        %v193 = vld [vmem:[%s166 + $0xc] sm:$0xf]
        %v194 = vld [vmem:[%s166 + $0x10] sm:$0xf]
        %v195 = vld [vmem:[%s166 + $0x14] sm:$0xf]
        %v196 = vld [vmem:[%s1] sm:$0xf]
        %v197 = vld [vmem:[%s1 + $0x4] sm:$0xf]
        %v204 = vunpack.c.l.b16 %v190
        %v205 = vunpack.c.l.b16 %v191
        %v206 = vunpack.c.l.b16 %v192
        %v207 = vunpack.c.l.b16 %v193
        %v208 = vunpack.c.l.b16 %v194
        %v209 = vunpack.c.l.b16 %v195
        %v210 = vpack.c.b16 %v205, %v204
        %v211 = vpack.c.b16 %v207, %v206
        %v212 = vpack.c.b16 %v209, %v208
        %v215 = vunpack.c.l.b16 %v196
        %v216 = vunpack.c.l.b16 %v197
        %v217 = vpack.c.b16 %v216, %v215
        %vm219 = vcmask 130048
        %v221 = vsel %vm219, %v210, 0
        %v224 = vsel %vm219, %v211, 0
        %v227 = vsel %vm219, %v212, 0
        %229 = vmatprep.subr.bf16.mxu0 0
        %230 = vmatpush1.bf16.msra.mxu0 0
        %231 = vmatprep.subr.bf16.mxu0 0
        %232 = vmatpush1.bf16.msra.mxu0 0
        %233 = vmatprep.subr.bf16.mxu0 0
        %234 = vmatpush1.bf16.msra.mxu0 0
        %235 = vmatprep.subr.bf16.mxu0 0
        %236 = vmatpush1.bf16.msra.mxu0 0
        %237 = vmatprep.subr.bf16.mxu0 0
        %238 = vmatpush1.bf16.msra.mxu0 0
        %239 = vmatprep.subr.bf16.mxu0 0
        %240 = vmatpush1.bf16.msra.mxu0 0
        %241 = vmatprep.subr.bf16.mxu0 0
        %242 = vmatpush1.bf16.msra.mxu0 0
        %243 = vmatprep.subr.bf16.mxu0 0
        %244 = vmatpush1.bf16.msra.mxu0 %v217
        %245 = vmatprep.subr.bf16.mxu0 0
        %246 = vmatpush2.bf16.msra.mxu0 0
        %247 = vmatprep.subr.bf16.mxu0 0
        %248 = vmatpush2.bf16.msra.mxu0 0
        %249 = vmatprep.subr.bf16.mxu0 0
        %250 = vmatpush2.bf16.msra.mxu0 0
        %251 = vmatprep.subr.bf16.mxu0 0
        %252 = vmatpush2.bf16.msra.mxu0 0
        %253 = vmatprep.subr.bf16.mxu0 0
        %254 = vmatpush2.bf16.msra.mxu0 0
        %255 = vmatprep.subr.bf16.mxu0 0
        %256 = vmatpush2.bf16.msra.mxu0 0
        %257 = vmatprep.subr.bf16.mxu0 0
        %258 = vmatpush2.bf16.msra.mxu0 0
        %259 = vmatprep.subr.bf16.mxu0 0
        %260 = vmatpush2.bf16.msra.mxu0 0
        %261 = vmatprep.mubr.bf16.mxu0 0
        %262 = vmatmul.mubr.bf16.gmra.mxu0 %v221
        %v263 = vpop.f32.mrf.mxu0
        %v264 = vadd.f32 0.0, %v263
        %v265 = vpop.f32.mrf.mxu0
        %v266 = vpop.f32.mrf.mxu0
        %v267 = vadd.f32 0.0, %v266
        %v268 = vpop.f32.mrf.mxu0
        %269 = vmatprep.mubr.bf16.mxu0 0
        %270 = vmatmul.mubr.bf16.gmra.mxu0 %v224
        %v271 = vpop.f32.mrf.mxu0
        %v272 = vadd.f32 0.0, %v271
        %v273 = vpop.f32.mrf.mxu0
        %v274 = vpop.f32.mrf.mxu0
        %v275 = vadd.f32 0.0, %v274
        %v276 = vpop.f32.mrf.mxu0
        %277 = vmatprep.mubr.bf16.mxu0 0
        %278 = vmatmul.mubr.bf16.gmra.mxu0 %v227
        %v279 = vpop.f32.mrf.mxu0
        %v280 = vadd.f32 0.0, %v279
        %v281 = vpop.f32.mrf.mxu0
        %v282 = vpop.f32.mrf.mxu0
        %v283 = vadd.f32 0.0, %v282
        %v284 = vpop.f32.mrf.mxu0
        %285 = vdwg.mxu0
        %v286 = vpack.c.bf16 %v267, %v264
        %v287 = vpack.c.bf16 %v275, %v272
        %v288 = vpack.c.bf16 %v283, %v280
        %v289 = vld [vmem:[%s2] sm:$0xf]
        %v290 = vld [vmem:[%s2 + $0x4] sm:$0xf]
        %v291 = vld [vmem:[%s2 + $0x8] sm:$0xf]
        %v292 = vld [vmem:[%s2 + $0xc] sm:$0xf]
        %v297 = vunpack.c.l.b16 %v289
        %v298 = vunpack.c.l.b16 %v290
        %v299 = vunpack.c.l.b16 %v291
        %v300 = vunpack.c.l.b16 %v292
        %v301 = vpack.c.b16 %v298, %v297
        %v302 = vpack.c.b16 %v300, %v299
        %v304 = vsel %vm219, %v301, 0
        %v307 = vsel %vm219, %v302, 0
        %309 = vmatprep.subr.bf16.mxu0 0
        %310 = vmatpush1.bf16.msra.mxu0 0
        %311 = vmatprep.subr.bf16.mxu0 0
        %312 = vmatpush1.bf16.msra.mxu0 0
        %313 = vmatprep.subr.bf16.mxu0 0
        %314 = vmatpush1.bf16.msra.mxu0 0
        %315 = vmatprep.subr.bf16.mxu0 0
        %316 = vmatpush1.bf16.msra.mxu0 0
        %317 = vmatprep.subr.bf16.mxu0 0
        %318 = vmatpush1.bf16.msra.mxu0 0
        %319 = vmatprep.subr.bf16.mxu0 0
        %320 = vmatpush1.bf16.msra.mxu0 0
        %321 = vmatprep.subr.bf16.mxu0 0
        %322 = vmatpush1.bf16.msra.mxu0 0
        %323 = vmatprep.subr.bf16.mxu0 0
        %324 = vmatpush1.bf16.msra.mxu0 %v286
        %325 = vmatprep.subr.bf16.mxu0 0
        %326 = vmatpush2.bf16.msra.mxu0 0
        %327 = vmatprep.subr.bf16.mxu0 0
        %328 = vmatpush2.bf16.msra.mxu0 0
        %329 = vmatprep.subr.bf16.mxu0 0
        %330 = vmatpush2.bf16.msra.mxu0 0
        %331 = vmatprep.subr.bf16.mxu0 0
        %332 = vmatpush2.bf16.msra.mxu0 0
        %333 = vmatprep.subr.bf16.mxu0 0
        %334 = vmatpush2.bf16.msra.mxu0 0
        %335 = vmatprep.subr.bf16.mxu0 0
        %336 = vmatpush2.bf16.msra.mxu0 0
        %337 = vmatprep.subr.bf16.mxu0 0
        %338 = vmatpush2.bf16.msra.mxu0 0
        %339 = vmatprep.subr.bf16.mxu0 0
        %340 = vmatpush2.bf16.msra.mxu0 0
        %341 = vmatprep.mubr.bf16.mxu0 0
        %342 = vmatmul.mubr.bf16.gmra.mxu0 %v304
        %v343 = vpop.f32.mrf.mxu0
        %v344 = vadd.f32 0.0, %v343
        %v345 = vpop.f32.mrf.mxu0
        %v346 = vpop.f32.mrf.mxu0
        %v347 = vadd.f32 0.0, %v346
        %v348 = vpop.f32.mrf.mxu0
        %349 = vmatprep.mubr.bf16.mxu0 0
        %350 = vmatmul.mubr.bf16.gmra.mxu0 %v307
        %v351 = vpop.f32.mrf.mxu0
        %v352 = vadd.f32 0.0, %v351
        %v353 = vpop.f32.mrf.mxu0
        %v354 = vpop.f32.mrf.mxu0
        %v355 = vadd.f32 0.0, %v354
        %v356 = vpop.f32.mrf.mxu0
        %357 = vdwg.mxu0
        %358 = vmatprep.subr.bf16.mxu0 0
        %359 = vmatpush1.bf16.msra.mxu0 0
        %360 = vmatprep.subr.bf16.mxu0 0
        %361 = vmatpush1.bf16.msra.mxu0 0
        %362 = vmatprep.subr.bf16.mxu0 0
        %363 = vmatpush1.bf16.msra.mxu0 0
        %364 = vmatprep.subr.bf16.mxu0 0
        %365 = vmatpush1.bf16.msra.mxu0 0
        %366 = vmatprep.subr.bf16.mxu0 0
        %367 = vmatpush1.bf16.msra.mxu0 0
        %368 = vmatprep.subr.bf16.mxu0 0
        %369 = vmatpush1.bf16.msra.mxu0 0
        %370 = vmatprep.subr.bf16.mxu0 0
        %371 = vmatpush1.bf16.msra.mxu0 0
        %372 = vmatprep.subr.bf16.mxu0 0
        %373 = vmatpush1.bf16.msra.mxu0 %v287
        %374 = vmatprep.subr.bf16.mxu0 0
        %375 = vmatpush2.bf16.msra.mxu0 0
        %376 = vmatprep.subr.bf16.mxu0 0
        %377 = vmatpush2.bf16.msra.mxu0 0
        %378 = vmatprep.subr.bf16.mxu0 0
        %379 = vmatpush2.bf16.msra.mxu0 0
        %380 = vmatprep.subr.bf16.mxu0 0
        %381 = vmatpush2.bf16.msra.mxu0 0
        %382 = vmatprep.subr.bf16.mxu0 0
        %383 = vmatpush2.bf16.msra.mxu0 0
        %384 = vmatprep.subr.bf16.mxu0 0
        %385 = vmatpush2.bf16.msra.mxu0 0
        %386 = vmatprep.subr.bf16.mxu0 0
        %387 = vmatpush2.bf16.msra.mxu0 0
        %388 = vmatprep.subr.bf16.mxu0 0
        %389 = vmatpush2.bf16.msra.mxu0 0
        %390 = vmatprep.mubr.bf16.mxu0 0
        %391 = vmatmul.mubr.bf16.gmra.mxu0 %v304
        %v392 = vpop.f32.mrf.mxu0
        %v393 = vadd.f32 0.0, %v392
        %v394 = vpop.f32.mrf.mxu0
        %v395 = vpop.f32.mrf.mxu0
        %v396 = vadd.f32 0.0, %v395
        %v397 = vpop.f32.mrf.mxu0
        %398 = vmatprep.mubr.bf16.mxu0 0
        %399 = vmatmul.mubr.bf16.gmra.mxu0 %v307
        %v400 = vpop.f32.mrf.mxu0
        %v401 = vadd.f32 0.0, %v400
        %v402 = vpop.f32.mrf.mxu0
        %v403 = vpop.f32.mrf.mxu0
        %v404 = vadd.f32 0.0, %v403
        %v405 = vpop.f32.mrf.mxu0
        %406 = vdwg.mxu0
        %407 = vmatprep.subr.bf16.mxu0 0
        %408 = vmatpush1.bf16.msra.mxu0 0
        %409 = vmatprep.subr.bf16.mxu0 0
        %410 = vmatpush1.bf16.msra.mxu0 0
        %411 = vmatprep.subr.bf16.mxu0 0
        %412 = vmatpush1.bf16.msra.mxu0 0
        %413 = vmatprep.subr.bf16.mxu0 0
        %414 = vmatpush1.bf16.msra.mxu0 0
        %415 = vmatprep.subr.bf16.mxu0 0
        %416 = vmatpush1.bf16.msra.mxu0 0
        %417 = vmatprep.subr.bf16.mxu0 0
        %418 = vmatpush1.bf16.msra.mxu0 0
        %419 = vmatprep.subr.bf16.mxu0 0
        %420 = vmatpush1.bf16.msra.mxu0 0
        %421 = vmatprep.subr.bf16.mxu0 0
        %422 = vmatpush1.bf16.msra.mxu0 %v288
        %423 = vmatprep.subr.bf16.mxu0 0
        %424 = vmatpush2.bf16.msra.mxu0 0
        %425 = vmatprep.subr.bf16.mxu0 0
        %426 = vmatpush2.bf16.msra.mxu0 0
        %427 = vmatprep.subr.bf16.mxu0 0
        %428 = vmatpush2.bf16.msra.mxu0 0
        %429 = vmatprep.subr.bf16.mxu0 0
        %430 = vmatpush2.bf16.msra.mxu0 0
        %431 = vmatprep.subr.bf16.mxu0 0
        %432 = vmatpush2.bf16.msra.mxu0 0
        %433 = vmatprep.subr.bf16.mxu0 0
        %434 = vmatpush2.bf16.msra.mxu0 0
        %435 = vmatprep.subr.bf16.mxu0 0
        %436 = vmatpush2.bf16.msra.mxu0 0
        %437 = vmatprep.subr.bf16.mxu0 0
        %438 = vmatpush2.bf16.msra.mxu0 0
        %439 = vmatprep.mubr.bf16.mxu0 0
        %440 = vmatmul.mubr.bf16.gmra.mxu0 %v304
        %v441 = vpop.f32.mrf.mxu0
        %v442 = vadd.f32 0.0, %v441
        %v443 = vpop.f32.mrf.mxu0
        %v444 = vpop.f32.mrf.mxu0
        %v445 = vadd.f32 0.0, %v444
        %v446 = vpop.f32.mrf.mxu0
        %447 = vmatprep.mubr.bf16.mxu0 0
        %448 = vmatmul.mubr.bf16.gmra.mxu0 %v307
        %v449 = vpop.f32.mrf.mxu0
        %v450 = vadd.f32 0.0, %v449
        %v451 = vpop.f32.mrf.mxu0
        %v452 = vpop.f32.mrf.mxu0
        %v453 = vadd.f32 0.0, %v452
        %v454 = vpop.f32.mrf.mxu0
        %455 = vdwg.mxu0
        %v456 = vpack.c.bf16 %v347, %v344
        %v457 = vpack.c.bf16 %v355, %v352
        %v458 = vpack.c.bf16 %v396, %v393
        %v459 = vpack.c.bf16 %v404, %v401
        %v460 = vpack.c.bf16 %v445, %v442
        %v461 = vpack.c.bf16 %v453, %v450
        %v468 = vunpack.c.l.b16 %v456
        %v469 = vunpack.c.h.b16 %v456
        %v470 = vunpack.c.l.b16 %v457
        %v471 = vunpack.c.h.b16 %v457
        %v472 = vunpack.c.l.b16 %v458
        %v473 = vunpack.c.h.b16 %v458
        %v474 = vunpack.c.l.b16 %v459
        %v475 = vunpack.c.h.b16 %v459
        %v476 = vunpack.c.l.b16 %v460
        %v477 = vunpack.c.h.b16 %v460
        %v478 = vunpack.c.l.b16 %v461
        %v479 = vunpack.c.h.b16 %v461
        %v480 = vpack.c.b16 %v468, %v468
        %v481 = vpack.c.b16 %v469, %v469
        %v482 = vpack.c.b16 %v470, %v470
        %v483 = vpack.c.b16 %v471, %v471
        %v484 = vpack.c.b16 %v472, %v472
        %v485 = vpack.c.b16 %v473, %v473
        %v486 = vpack.c.b16 %v474, %v474
        %v487 = vpack.c.b16 %v475, %v475
        %v488 = vpack.c.b16 %v476, %v476
        %v489 = vpack.c.b16 %v477, %v477
        %v490 = vpack.c.b16 %v478, %v478
        %v491 = vpack.c.b16 %v479, %v479
        %vm504 = vcmask 257024
        %505 = vst.msk [vmem:[%s188] sm:$0xf] %vm504, %v480
        %506 = vst.msk [vmem:[%s188 + $0x4] sm:$0xf] %vm504, %v481
        %507 = vst.msk [vmem:[%s188 + $0x8] sm:$0xf] %vm504, %v482
        %508 = vst.msk [vmem:[%s188 + $0xc] sm:$0xf] %vm504, %v483
        %509 = vst.msk [vmem:[%s188 + $0x10] sm:$0xf] %vm504, %v484
        %510 = vst.msk [vmem:[%s188 + $0x14] sm:$0xf] %vm504, %v485
        %511 = vst.msk [vmem:[%s188 + $0x18] sm:$0xf] %vm504, %v486
        %512 = vst.msk [vmem:[%s188 + $0x1c] sm:$0xf] %vm504, %v487
        %513 = vst.msk [vmem:[%s188 + $0x20] sm:$0xf] %vm504, %v488
        %514 = vst.msk [vmem:[%s188 + $0x24] sm:$0xf] %vm504, %v489
        %515 = vst.msk [vmem:[%s188 + $0x28] sm:$0xf] %vm504, %v490
        %516 = vst.msk [vmem:[%s188 + $0x2c] sm:$0xf] %vm504, %v491
        %s517 = sand.u32 %s96, 1
        %s518 = scalar_lea.sflag [#allocation4], %s517
        %s519 = sand.u32 %s96, 1
        %s520 = smul.addr %s519, 48
        %s521 = scalar_lea.vmem [#allocation5], %s520
        // Predicated region
        $region37: #{tpu_custom_call.1} parent=31 // pred_check
          %p522 = pneg %p106
        $region38: #{tpu_custom_call.1} parent=31 // pred_check_branch
          %524 = sbr.rel (%p522) target = $region40
        $region39: #{tpu_custom_call.1} parent=31 // pred_region
          %s526 = ssub.s32 768, 768
          %527 = vsyncadd %s518, %s526
          %s528 = smul.addr %s20, 12
          %s529 = smul.addr %s528, 64
          %s530 = scalar_lea.hbm %s3, %s529
          %s531 = sshll.u32 %s521, 4
          %s532 = int_to_ptr.vmem [resolvable:$true] %s531
          %537 = dma.vmem_to_hbm [thread:$0]  %s532, 768, %s530, %s518, 64, 64, 4
        $region40: #{tpu_custom_call.1} parent=31 // pred_fallthru
          _
      $region32: #{tpu_custom_call.1} parent=5 // pred_fallthru
        _
      %p538 = scmp.le.s32.totalorder 2, %s15
      // Predicated region
      $region41: #{tpu_custom_call.1} parent=5 // pred_check
        %p539 = pneg %p538
      $region42: #{tpu_custom_call.1} parent=5 // pred_check_branch
        %541 = sbr.rel (%p539) target = $region44
      $region43: #{tpu_custom_call.1} parent=5 // pred_region
        %s542 = ssub.s32 %s15, 2
        // Predicated region
        $region45: #{tpu_custom_call.1} parent=43 // pred_check
          %p543 = pneg %p112
        $region46: #{tpu_custom_call.1} parent=43 // pred_check_branch
          %545 = sbr.rel (%p543) target = $region48
        $region47: #{tpu_custom_call.1} parent=43 // pred_region
          %s546 = sand.u32 %s97, 1
          %s547 = scalar_lea.sflag [#allocation4], %s546
          %s548 = sand.u32 %s97, 1
          %s549 = smul.addr %s548, 48
          %s550 = scalar_lea.vmem [#allocation5], %s549
          %551 = dma.done %s547, 768
        $region48: #{tpu_custom_call.1} parent=43 // pred_fallthru
          _
      $region44: #{tpu_custom_call.1} parent=5 // pred_fallthru
        _
    $region6: #{tpu_custom_call.1} parent=1 // loop_footer
      %s19 = sadd.s32 1, %s15
    $region7: #{tpu_custom_call.1} parent=1 // loop_footer_branch
      %14 = sbr.rel target = $region3
    $region8: #{tpu_custom_call.1} parent=1 // loop_exit
      _
    %552 = vsyncpa [#allocation3], 1
    %s553 = scalar_lea.sflag [#allocation3], 1
    %554 = vsyncpa %s553, 1
    %555 = vsyncpa [#allocation4], 1
    %s556 = scalar_lea.sflag [#allocation4], 1
    %557 = vsyncpa %s556, 1

</llo_original>
